<compile_context>
chip_gen: v7x
topology: tpu7x:2x2x1
jax: 0.10.0
libtpu: 0.0.40
codegen_flags: <defaults>
</compile_context>

<pallas_src>
import functools
import math

import jax
import jax.numpy as jnp
from jax.experimental import pallas as pl
from jax.experimental.pallas import tpu as pltpu


def pos_encoding_kernel(x_ref, pe_ref, o_ref, *, batch, d_model):
    # x_ref / o_ref : (ts, B*D) flattened rows;   pe_ref : (ts, D)
    # Load pe once per tile; broadcast over the batch slots with a static,
    # fully-unrolled loop of aligned lane-slices (D multiple of 128 -> no
    # masked partial stores, no sublane relayout).
    pe = pe_ref[...]
    for b in range(batch):
        sl = slice(b * d_model, (b + 1) * d_model)
        o_ref[:, sl] = x_ref[:, sl] + pe


def _choose_seq_tile(s, b, d, itemsize, target_bytes=4 << 20):
    """Rows of the flattened (S, B*D) slab per grid step.

    Padding-aware: the lane dim rounds up to 128 and the row (sublane) dim to
    8 when computing VMEM bytes.  For large S the tile is capped so the grid
    keeps >= 2 steps, letting the "parallel" seq axis split across the two
    TensorCores on v7x (no-op on v5e/v6e).
    """
    lanes = pl.cdiv(b * d, 128) * 128
    row_bytes = lanes * itemsize
    rows = max(8, target_bytes // row_bytes)
    if s >= 16:
        rows = min(rows, (s // 2) // 8 * 8)      # keep >= 2 grid steps (v7x 2-TC)
    rows = min(rows, s)
    if rows < s:
        rows = max(8, rows // 8 * 8)             # sublane dim multiple of 8
    return int(rows)


def positional_encoding(x, pe, *, ts=None):
    """x: (S, B, D); pe: (max_len, D) with max_len >= S.

    Lane-dense contract: B*D should be a multiple of 128 for unmasked
    full-vreg stores (the real module's d_model=256 satisfies this); smaller
    D still runs correctly, just with masked partial stores.
    """
    s, b, d = x.shape
    assert pe.shape[0] >= s and pe.shape[1] == d
    itemsize = x.dtype.itemsize

    if ts is None:
        ts = _choose_seq_tile(s, b, d, itemsize)

    # Free reshape: (S, B, D) is contiguous, so (S, B*D) is the same buffer.
    x2 = x.reshape(s, b * d)

    # If the seq tile is not sublane-aligned (tiny S), make the pe block's
    # first dim equal to its full extent so the (8,128) rule is satisfied.
    if ts % 8 != 0 and pe.shape[0] != ts:
        pe = pe[:s]

    grid = (pl.cdiv(s, ts),)

    # Padding-aware VMEM budget: double-buffered x-in + out + pe.
    ts_pad = pl.cdiv(ts, 8) * 8
    x_slab = ts_pad * (pl.cdiv(b * d, 128) * 128) * itemsize
    pe_slab = ts_pad * (pl.cdiv(d, 128) * 128) * itemsize
    footprint = 2 * x_slab + 2 * x_slab + 2 * pe_slab
    vmem_limit = int(min(48 << 20, max(32 << 20, int(footprint * 1.5))))

    kernel = functools.partial(pos_encoding_kernel, batch=b, d_model=d)

    out2 = pl.pallas_call(
        kernel,
        out_shape=jax.ShapeDtypeStruct((s, b * d), x.dtype),
        grid_spec=pl.GridSpec(
            grid=grid,
            in_specs=[
                pl.BlockSpec((ts, b * d), lambda i: (i, 0)),  # flattened x rows
                pl.BlockSpec((ts, d), lambda i: (i, 0)),      # pe seq tile
            ],
            out_specs=pl.BlockSpec((ts, b * d), lambda i: (i, 0)),
        ),
        compiler_params=pltpu.CompilerParams(
            dimension_semantics=("parallel",),
            vmem_limit_bytes=vmem_limit,
        ),
    )(x2, pe)
    return out2.reshape(s, b, d)


def make_pe(max_len, d_model):
    """Sinusoidal table, identical construction to the PyTorch module."""
    assert d_model % 2 == 0, "d_model must be even (same limitation as the PyTorch module)"
    position = jnp.arange(max_len, dtype=jnp.float32)[:, None]
    div_term = jnp.exp(
        jnp.arange(0, d_model, 2, dtype=jnp.float32) * (-math.log(10000.0) / d_model)
    )
    pe = jnp.zeros((max_len, d_model), dtype=jnp.float32)
    pe = pe.at[:, 0::2].set(jnp.sin(position * div_term))
    pe = pe.at[:, 1::2].set(jnp.cos(position * div_term))
    return pe


def reference(x, pe):
    s = x.shape[0]
    # dropout is identity in eval mode
    return x + pe[:s][:, None, :]


if __name__ == "__main__":
    # Small shapes consistent with the module: d_model=256 (real module's embed
    # dim, keeps B*D lane-dense), seq=8, batch=2.
    seq_len = 8
    batch = 2
    d_model = 256
    max_len = 32

    key = jax.random.PRNGKey(0)
    x = jax.random.normal(key, (seq_len, batch, d_model), dtype=jnp.float32)
    pe = make_pe(max_len, d_model)

    out = positional_encoding(x, pe)
    out = jax.block_until_ready(out)
    ref = reference(x, pe)
    assert out.shape == (seq_len, batch, d_model)
    assert jnp.allclose(out, ref, atol=1e-6, rtol=1e-6), "mismatch vs reference"

    # Partial-last-tile case (S not a multiple of ts): exercises Pallas block
    # clamping/padding on the final grid step.
    seq_len2 = 20
    x2 = jax.random.normal(jax.random.PRNGKey(1), (seq_len2, batch, d_model), dtype=jnp.float32)
    out2 = jax.block_until_ready(positional_encoding(x2, pe, ts=8))
    ref2 = reference(x2, pe)
    assert jnp.allclose(out2, ref2, atol=1e-6, rtol=1e-6), "mismatch vs reference (partial tile)"

    print("KERNEL_OK")
</pallas_src>

<mosaic_0001>
module attributes {stable_mosaic.version = 11 : i64} {
  func.func @pos_encoding_kernel(%arg0: i32, %arg1: memref<8x512xf32, #tpu.memory_space<vmem>>, %arg2: memref<8x256xf32, #tpu.memory_space<vmem>>, %arg3: memref<8x512xf32, #tpu.memory_space<vmem>>) attributes {dimension_semantics = [#tpu.dimension_semantics<parallel>], iteration_bounds = array<i64: 1>, scalar_prefetch = 0 : i64, scratch_operands = 0 : i64, tpu.core_type = #tpu.core_type<tc>, window_params = [{transform_indices = @transform_0, window_bounds = array<i64: 8, 512>}, {transform_indices = @transform_1, window_bounds = array<i64: 8, 256>}, {transform_indices = @transform_2, window_bounds = array<i64: 8, 512>}]} {
    %c0 = arith.constant 0 : index
    %c0_0 = arith.constant 0 : index
    %0 = vector.load %arg2[%c0, %c0_0] : memref<8x256xf32, #tpu.memory_space<vmem>>, vector<8x256xf32>
    %c0_1 = arith.constant 0 : index
    %c0_2 = arith.constant 0 : index
    %1 = vector.load %arg1[%c0_1, %c0_2] : memref<8x512xf32, #tpu.memory_space<vmem>>, vector<8x256xf32>
    %2 = arith.addf %1, %0 : vector<8x256xf32>
    %c0_3 = arith.constant 0 : index
    %c0_4 = arith.constant 0 : index
    %3 = vector.load %arg3[%c0_3, %c0_4] : memref<8x512xf32, #tpu.memory_space<vmem>>, vector<8x256xf32>
    tpu.vector_store %arg3[%c0_3, %c0_4], %2 {strides = array<i32>} : memref<8x512xf32, #tpu.memory_space<vmem>>, vector<8x256xf32>,
    %c0_5 = arith.constant 0 : index
    %c256 = arith.constant 256 : index
    %4 = vector.load %arg1[%c0_5, %c256] : memref<8x512xf32, #tpu.memory_space<vmem>>, vector<8x256xf32>
    %5 = arith.addf %4, %0 : vector<8x256xf32>
    %c0_6 = arith.constant 0 : index
    %c256_7 = arith.constant 256 : index
    %6 = vector.load %arg3[%c0_6, %c256_7] : memref<8x512xf32, #tpu.memory_space<vmem>>, vector<8x256xf32>
    tpu.vector_store %arg3[%c0_6, %c256_7], %5 {strides = array<i32>} : memref<8x512xf32, #tpu.memory_space<vmem>>, vector<8x256xf32>,
    return
  }
  func.func @transform_0(%arg0: i32) -> (i32, i32) {
    %c0_i32 = arith.constant 0 : i32
    %c0_i32_0 = arith.constant 0 : i32
    return %arg0, %c0_i32 : i32, i32
  }
  func.func @transform_1(%arg0: i32) -> (i32, i32) {
    %c0_i32 = arith.constant 0 : i32
    %c0_i32_0 = arith.constant 0 : i32
    return %arg0, %c0_i32 : i32, i32
  }
  func.func @transform_2(%arg0: i32) -> (i32, i32) {
    %c0_i32 = arith.constant 0 : i32
    %c0_i32_0 = arith.constant 0 : i32
    return %arg0, %c0_i32 : i32, i32
  }
}

</mosaic_0001>

<llo_original>
// kernel: tpu_custom_call.1
$region0: #{tpu_custom_call.1}
  #allocation0 [shape = 'u32[]', space=smem, size = 0x4, offset = 0x4, fixed_abs, tag = 'smem constant byte address 0x4 - core index']
  #allocation1 [shape = 'u32[144,128]{1,0:T(1,128)}', space=vmem, size = 0x12000, scoped, tag = 'internal scratch']
  %s0 = inlined_call_operand.hbm [shape: f32[8,512], index: 0, kind: input, shape index: {}]
  %s1 = inlined_call_operand.hbm [shape: f32[32,256], index: 1, kind: input, shape index: {}]
  %s2 = inlined_call_operand.hbm [shape: f32[8,512], index: 2, kind: output, shape index: {}]
  %s3 = sld [smem:[#allocation0]]
  $region26: #{tpu_custom_call.1} parent=0
    _
  %s5 = ssub.s32 1, %s3
  %s6 = scalar_select 0, %s5, %s3
  $region1: #{tpu_custom_call.1} parent=0
    #allocation2 [shape = 'u8[16384]{0}', space=vmem, size = 0x4000, scoped, tag = 'input window, operand 0, single buffered']
    #allocation3 [shape = 's32[1]{0}', space=sflag, size = 0x4, scoped, tag = 'scoped memory for tpu_custom_call.1']
    #allocation4 [shape = 's32[1]{0}', space=sflag, size = 0x4, scoped, tag = 'scoped memory for tpu_custom_call.1']
    #allocation5 [shape = 'u8[8192]{0}', space=vmem, size = 0x2000, scoped, tag = 'input window, operand 1, single buffered']
    #allocation6 [shape = 's32[1]{0}', space=sflag, size = 0x4, scoped, tag = 'scoped memory for tpu_custom_call.1']
    #allocation7 [shape = 'u8[16384]{0}', space=vmem, size = 0x4000, scoped, tag = 'output window, operand 0, single buffered']
    %7 = vsyncpa [#allocation3], 0
    %8 = vsyncpa [#allocation6], 0
    %9 = vsyncpa [#allocation4], 0
    // Predicated region
    $region2: #{tpu_custom_call.1} parent=1 // pred_check
      _
    $region3: #{tpu_custom_call.1} parent=1 // pred_check_branch
      %11 = sbr.rel (0) target = $region5
    $region4: #{tpu_custom_call.1} parent=1 // pred_region
      %s13 = ssub.s32 512, 512
      %14 = vsyncadd [#allocation3], %s13
      %s16 = sshll.u32 [#allocation2], 4
      %s17 = int_to_ptr.vmem [resolvable:$true] %s16
      %19 = dma.hbm_to_vmem [thread:$0]  %s0, 512, %s17, [#allocation3]
    $region5: #{tpu_custom_call.1} parent=1 // pred_fallthru
      _
    // Predicated region
    $region6: #{tpu_custom_call.1} parent=1 // pred_check
      _
    $region7: #{tpu_custom_call.1} parent=1 // pred_check_branch
      %21 = sbr.rel (0) target = $region9
    $region8: #{tpu_custom_call.1} parent=1 // pred_region
      %s23 = ssub.s32 256, 256
      %24 = vsyncadd [#allocation6], %s23
      %s26 = sshll.u32 [#allocation5], 4
      %s27 = int_to_ptr.vmem [resolvable:$true] %s26
      %29 = dma.hbm_to_vmem [thread:$0]  %s1, 256, %s27, [#allocation6]
    $region9: #{tpu_custom_call.1} parent=1 // pred_fallthru
      _
    // Predicated region
    $region10: #{tpu_custom_call.1} parent=1 // pred_check
      _
    $region11: #{tpu_custom_call.1} parent=1 // pred_check_branch
      %31 = sbr.rel (0) target = $region13
    $region12: #{tpu_custom_call.1} parent=1 // pred_region
      %32 = dma.done [#allocation3], 512
    $region13: #{tpu_custom_call.1} parent=1 // pred_fallthru
      _
    // Predicated region
    $region14: #{tpu_custom_call.1} parent=1 // pred_check
      _
    $region15: #{tpu_custom_call.1} parent=1 // pred_check_branch
      %34 = sbr.rel (0) target = $region17
    $region16: #{tpu_custom_call.1} parent=1 // pred_region
      %35 = dma.done [#allocation6], 256
    $region17: #{tpu_custom_call.1} parent=1 // pred_fallthru
      _
    %v36 = vld [vmem:[#allocation5] sm:$0xff]
    %v37 = vld [vmem:[#allocation5 + $0x8] sm:$0xff]
    %v38 = vld [vmem:[#allocation2] sm:$0xff]
    %v39 = vld [vmem:[#allocation2 + $0x8] sm:$0xff]
    %v40 = vadd.f32 %v38, %v36
    %v41 = vadd.f32 %v39, %v37
    %42 = vst [vmem:[#allocation7] sm:$0xff] %v40
    %43 = vst [vmem:[#allocation7 + $0x8] sm:$0xff] %v41
    %v44 = vld [vmem:[#allocation2 + $0x10] sm:$0xff]
    %v45 = vld [vmem:[#allocation2 + $0x18] sm:$0xff]
    %v46 = vadd.f32 %v44, %v36
    %v47 = vadd.f32 %v45, %v37
    %48 = vst [vmem:[#allocation7 + $0x10] sm:$0xff] %v46
    %49 = vst [vmem:[#allocation7 + $0x18] sm:$0xff] %v47
    // Predicated region
    $region18: #{tpu_custom_call.1} parent=1 // pred_check
      _
    $region19: #{tpu_custom_call.1} parent=1 // pred_check_branch
      %51 = sbr.rel (0) target = $region21
    $region20: #{tpu_custom_call.1} parent=1 // pred_region
      %s53 = ssub.s32 512, 512
      %54 = vsyncadd [#allocation4], %s53
      %s56 = sshll.u32 [#allocation7], 4
      %s57 = int_to_ptr.vmem [resolvable:$true] %s56
      %59 = dma.vmem_to_hbm [thread:$0]  %s57, 512, %s2, [#allocation4]
    $region21: #{tpu_custom_call.1} parent=1 // pred_fallthru
      _
    // Predicated region
    $region22: #{tpu_custom_call.1} parent=1 // pred_check
      _
    $region23: #{tpu_custom_call.1} parent=1 // pred_check_branch
      %61 = sbr.rel (0) target = $region25
    $region24: #{tpu_custom_call.1} parent=1 // pred_region
      %62 = dma.done [#allocation4], 512
    $region25: #{tpu_custom_call.1} parent=1 // pred_fallthru
      _
    %63 = vsyncpa [#allocation3], 1
    %64 = vsyncpa [#allocation6], 1
    %65 = vsyncpa [#allocation4], 1

</llo_original>
